<compile_context>
chip_gen: v5e
topology: v5e:2x2
jax: 0.10.0
libtpu: 0.0.40
codegen_flags: <defaults>
</compile_context>

<pallas_src>
import functools

import jax
import jax.numpy as jnp
from jax import lax
from jax.experimental import pallas as pl
from jax.experimental.pallas import tpu as pltpu


_LANE = 128                       # pad all channel dims to a multiple of this
_VMEM_LIMIT = 32 * 1024 * 1024    # safe on v5e/v6e/v7x; working set is far below


def _round_up(x, m):
    return (x + m - 1) // m * m


def _tile_m(m):
    """Pad M to a multiple of 256 and pick the largest row tile (prefer 512)."""
    mp = _round_up(m, 256)
    tm = 512 if mp % 512 == 0 else 256
    return mp, tm


def _cparams():
    return pltpu.CompilerParams(
        dimension_semantics=("parallel",),
        vmem_limit_bytes=_VMEM_LIMIT,
    )


# ---------------------------------------------------------------------------
# Pallas kernels
# ---------------------------------------------------------------------------

def _mm_bias_relu_kernel(x_ref, w_ref, b_ref, o_ref):
    # o = relu(x @ w + b); x/w are bf16, accumulate in f32 on the MXU.
    acc = jnp.dot(x_ref[...], w_ref[...], preferred_element_type=jnp.float32)
    o_ref[...] = jnp.maximum(acc + b_ref[...], 0.0).astype(o_ref.dtype)


def _conv3x3_bias_relu_kernel(x_ref, w_ref, b_ref, o_ref, *, stride, ho, wo):
    # 3x3 conv (spatial pad already applied to the input) as 9 shifted matmuls
    # accumulated in f32 — no im2col materialization in HBM.
    cin = x_ref.shape[-1]
    acc = jnp.zeros((ho * wo, o_ref.shape[-1]), jnp.float32)
    for dh in range(3):
        for dw in range(3):
            if stride == 1:
                patch = x_ref[0, pl.ds(dh, ho), pl.ds(dw, wo), :]
            else:
                patch = x_ref[0, pl.ds(dh, ho, stride), pl.ds(dw, wo, stride), :]
            acc = acc + jnp.dot(patch.reshape(ho * wo, cin),
                                w_ref[dh * 3 + dw],
                                preferred_element_type=jnp.float32)
    o_ref[0] = jnp.maximum(acc + b_ref[...], 0.0).astype(o_ref.dtype)


def _proj_out_kernel(a_ref, s_ref, w3_ref, b3_ref, ws_ref, bs_ref, o_ref):
    # o = relu((a @ w3 + b3) + (s @ ws + bs))  -- projection shortcut
    main = jnp.dot(a_ref[...], w3_ref[...],
                   preferred_element_type=jnp.float32) + b3_ref[...]
    sc = jnp.dot(s_ref[...], ws_ref[...],
                 preferred_element_type=jnp.float32) + bs_ref[...]
    o_ref[...] = jnp.maximum(main + sc, 0.0).astype(o_ref.dtype)


def _ident_out_kernel(a_ref, s_ref, w3_ref, b3_ref, o_ref):
    # o = relu((a @ w3 + b3) + s)  -- identity shortcut fast path (no eye matmul)
    main = jnp.dot(a_ref[...], w3_ref[...],
                   preferred_element_type=jnp.float32) + b3_ref[...]
    o_ref[...] = jnp.maximum(main + s_ref[...].astype(jnp.float32),
                             0.0).astype(o_ref.dtype)


# ---------------------------------------------------------------------------
# pallas_call wrappers
# ---------------------------------------------------------------------------

def mm_bias_relu(x, w, b, out_dtype):
    """x: (M, K) bf16, w: (K, C) bf16, b: (C,) f32 -> relu(x@w+b) as (M, C)."""
    m, k = x.shape
    c = w.shape[1]
    mp, tm = _tile_m(m)
    if mp != m:
        x = jnp.pad(x, ((0, mp - m), (0, 0)))
    out = pl.pallas_call(
        _mm_bias_relu_kernel,
        out_shape=jax.ShapeDtypeStruct((mp, c), out_dtype),
        grid_spec=pltpu.PrefetchScalarGridSpec(
            num_scalar_prefetch=0,
            grid=(mp // tm,),
            in_specs=[
                pl.BlockSpec((tm, k), lambda i: (i, 0)),
                pl.BlockSpec((k, c), lambda i: (0, 0)),
                pl.BlockSpec((1, c), lambda i: (0, 0)),
            ],
            out_specs=pl.BlockSpec((tm, c), lambda i: (i, 0)),
        ),
        compiler_params=_cparams(),
    )(x, w, b.reshape(1, -1).astype(jnp.float32))
    return out[:m] if mp != m else out


def conv3x3_bias_relu(x_padded, w_taps, b, stride, ho, wo, out_dtype):
    """x_padded: (N, H+2, W+2, Cin) bf16, w_taps: (9, Cin, Co) bf16, b: (Co,).

    Returns relu(conv3x3(x, w) + b) flattened spatially: (N, ho*wo, Co).
    """
    n, hp, wp, cin = x_padded.shape
    co = w_taps.shape[-1]
    kernel = functools.partial(_conv3x3_bias_relu_kernel,
                               stride=stride, ho=ho, wo=wo)
    return pl.pallas_call(
        kernel,
        out_shape=jax.ShapeDtypeStruct((n, ho * wo, co), out_dtype),
        grid_spec=pltpu.PrefetchScalarGridSpec(
            num_scalar_prefetch=0,
            grid=(n,),
            in_specs=[
                pl.BlockSpec((1, hp, wp, cin), lambda i: (i, 0, 0, 0)),
                pl.BlockSpec((9, cin, co), lambda i: (0, 0, 0)),
                pl.BlockSpec((1, co), lambda i: (0, 0)),
            ],
            out_specs=pl.BlockSpec((1, ho * wo, co), lambda i: (i, 0, 0)),
        ),
        compiler_params=_cparams(),
    )(x_padded, w_taps, b.reshape(1, -1).astype(jnp.float32))


def proj_shortcut_out(a, s, w3, b3, ws, bs):
    """relu((a@w3+b3) + (s@ws+bs)); a: (M, P) bf16, s: (M, Cin) bf16 -> (M, C) f32."""
    m, p = a.shape
    c = w3.shape[1]
    cin = s.shape[1]
    mp, tm = _tile_m(m)
    if mp != m:
        a = jnp.pad(a, ((0, mp - m), (0, 0)))
        s = jnp.pad(s, ((0, mp - m), (0, 0)))
    out = pl.pallas_call(
        _proj_out_kernel,
        out_shape=jax.ShapeDtypeStruct((mp, c), jnp.float32),
        grid_spec=pltpu.PrefetchScalarGridSpec(
            num_scalar_prefetch=0,
            grid=(mp // tm,),
            in_specs=[
                pl.BlockSpec((tm, p), lambda i: (i, 0)),
                pl.BlockSpec((tm, cin), lambda i: (i, 0)),
                pl.BlockSpec((p, c), lambda i: (0, 0)),
                pl.BlockSpec((1, c), lambda i: (0, 0)),
                pl.BlockSpec((cin, c), lambda i: (0, 0)),
                pl.BlockSpec((1, c), lambda i: (0, 0)),
            ],
            out_specs=pl.BlockSpec((tm, c), lambda i: (i, 0)),
        ),
        compiler_params=_cparams(),
    )(a, s, w3, b3.reshape(1, -1).astype(jnp.float32),
      ws, bs.reshape(1, -1).astype(jnp.float32))
    return out[:m] if mp != m else out


def identity_shortcut_out(a, s, w3, b3):
    """relu((a@w3+b3) + s); identity shortcut, s kept in f32 (no matmul)."""
    m, p = a.shape
    c = w3.shape[1]
    mp, tm = _tile_m(m)
    if mp != m:
        a = jnp.pad(a, ((0, mp - m), (0, 0)))
        s = jnp.pad(s, ((0, mp - m), (0, 0)))
    out = pl.pallas_call(
        _ident_out_kernel,
        out_shape=jax.ShapeDtypeStruct((mp, c), jnp.float32),
        grid_spec=pltpu.PrefetchScalarGridSpec(
            num_scalar_prefetch=0,
            grid=(mp // tm,),
            in_specs=[
                pl.BlockSpec((tm, p), lambda i: (i, 0)),
                pl.BlockSpec((tm, c), lambda i: (i, 0)),
                pl.BlockSpec((p, c), lambda i: (0, 0)),
                pl.BlockSpec((1, c), lambda i: (0, 0)),
            ],
            out_specs=pl.BlockSpec((tm, c), lambda i: (i, 0)),
        ),
        compiler_params=_cparams(),
    )(a, s, w3, b3.reshape(1, -1).astype(jnp.float32))
    return out[:m] if mp != m else out


# ---------------------------------------------------------------------------
# Glue (plain JAX): BN folding, channel padding, layout conversion
# ---------------------------------------------------------------------------

def _fold_conv_bn(w_oihw, bn, eps=1e-5):
    """Fold inference-mode BN into conv weight + bias (per output channel)."""
    scale = bn["gamma"] / jnp.sqrt(bn["var"] + eps)
    w = w_oihw * scale[:, None, None, None]
    b = bn["beta"] - bn["mean"] * scale
    return w, b


def _pad2(a, rows, cols):
    return jnp.pad(a, ((0, rows - a.shape[0]), (0, cols - a.shape[1])))


def _pad1(a, n):
    return jnp.pad(a, (0, n - a.shape[0]))


def bottleneck_forward(x_nchw, p, stride):
    n, cin, h, w = x_nchw.shape
    planes = p["w1"].shape[0]
    exp4 = p["w3"].shape[0]
    ho = (h + 2 - 3) // stride + 1
    wo = (w + 2 - 3) // stride + 1

    cin_p = _round_up(cin, _LANE)
    mid_p = _round_up(planes, _LANE)
    c4_p = _round_up(exp4, _LANE)

    x = jnp.transpose(x_nchw, (0, 2, 3, 1))                       # NHWC
    x_cp = jnp.pad(x, ((0, 0), (0, 0), (0, 0), (0, cin_p - cin)))  # lane pad

    # conv1 (1x1) + bn1 + relu  (BN folded, bf16 operands, bf16 output)
    w1f, b1 = _fold_conv_bn(p["w1"], p["bn1"])
    w1m = _pad2(w1f[:, :, 0, 0].T, cin_p, mid_p).astype(jnp.bfloat16)
    out1 = mm_bias_relu(x_cp.reshape(n * h * w, cin_p).astype(jnp.bfloat16),
                        w1m, _pad1(b1, mid_p), jnp.bfloat16)
    out1 = out1.reshape(n, h, w, mid_p)

    # conv2 (3x3, stride, pad=1) + bn2 + relu — 9 in-kernel shifted matmuls,
    # no im2col materialized in HBM.
    w2f, b2 = _fold_conv_bn(p["w2"], p["bn2"])
    taps = [_pad2(w2f[:, :, dh, dw].T, mid_p, mid_p)
            for dh in range(3) for dw in range(3)]
    w2m = jnp.stack(taps, axis=0).astype(jnp.bfloat16)             # (9, mid_p, mid_p)
    out1_sp = jnp.pad(out1, ((0, 0), (1, 1), (1, 1), (0, 0)))      # spatial halo
    out2 = conv3x3_bias_relu(out1_sp, w2m, _pad1(b2, mid_p),
                             stride, ho, wo, jnp.bfloat16)         # (n, ho*wo, mid_p)

    # conv3 (1x1) + bn3 + shortcut + relu (fused Pallas kernel)
    w3f, b3 = _fold_conv_bn(p["w3"], p["bn3"])
    w3m = _pad2(w3f[:, :, 0, 0].T, mid_p, c4_p).astype(jnp.bfloat16)
    a = out2.reshape(n * ho * wo, mid_p)
    x_s = x_cp[:, ::stride, ::stride, :]                           # (n, ho, wo, cin_p)

    if p["has_sc"]:
        wsf, bs = _fold_conv_bn(p["ws"], p["bns"])
        wsm = _pad2(wsf[:, :, 0, 0].T, cin_p, c4_p).astype(jnp.bfloat16)
        s = x_s.reshape(n * ho * wo, cin_p).astype(jnp.bfloat16)
        out = proj_shortcut_out(a, s, w3m, _pad1(b3, c4_p), wsm, _pad1(bs, c4_p))
    else:
        # identity shortcut: direct add (skip the eye() matmul entirely)
        assert cin_p == c4_p
        s = x_s.reshape(n * ho * wo, cin_p)
        out = identity_shortcut_out(a, s, w3m, _pad1(b3, c4_p))

    out = out[:, :exp4].reshape(n, ho, wo, exp4)
    return jnp.transpose(out, (0, 3, 1, 2))                        # back to NCHW


# ---------------------------------------------------------------------------
# Parameters (deterministic, synthetic) and a pure-JAX NCHW reference
# ---------------------------------------------------------------------------

def _make_bn(key, c):
    k1, k2, k3, k4 = jax.random.split(key, 4)
    return {
        "gamma": jax.random.uniform(k1, (c,), jnp.float32, 0.5, 1.5),
        "beta": jax.random.normal(k2, (c,), jnp.float32) * 0.1,
        "mean": jax.random.normal(k3, (c,), jnp.float32) * 0.1,
        "var": jax.random.uniform(k4, (c,), jnp.float32, 0.5, 1.5),
    }


def make_params(key, in_planes, planes, stride):
    exp = 4
    ks = jax.random.split(key, 8)
    p = {
        "w1": jax.random.normal(ks[0], (planes, in_planes, 1, 1), jnp.float32) * 0.1,
        "w2": jax.random.normal(ks[1], (planes, planes, 3, 3), jnp.float32) * 0.1,
        "w3": jax.random.normal(ks[2], (exp * planes, planes, 1, 1), jnp.float32) * 0.1,
        "bn1": _make_bn(ks[3], planes),
        "bn2": _make_bn(ks[4], planes),
        "bn3": _make_bn(ks[5], exp * planes),
        "has_sc": (stride != 1) or (in_planes != exp * planes),
    }
    if p["has_sc"]:
        p["ws"] = jax.random.normal(ks[6], (exp * planes, in_planes, 1, 1), jnp.float32) * 0.1
        p["bns"] = _make_bn(ks[7], exp * planes)
    return p


def reference_forward(x, p, stride, eps=1e-5):
    def conv(x, w, s, pad):
        return lax.conv_general_dilated(
            x, w, (s, s), pad, dimension_numbers=("NCHW", "OIHW", "NCHW"),
            precision=lax.Precision.HIGHEST)

    def bn(x, b):
        g, be, m, v = b["gamma"], b["beta"], b["mean"], b["var"]
        inv = g / jnp.sqrt(v + eps)
        return (x - m[None, :, None, None]) * inv[None, :, None, None] \
            + be[None, :, None, None]

    out = jax.nn.relu(bn(conv(x, p["w1"], 1, "VALID"), p["bn1"]))
    out = jax.nn.relu(bn(conv(out, p["w2"], stride, ((1, 1), (1, 1))), p["bn2"]))
    out = bn(conv(out, p["w3"], 1, "VALID"), p["bn3"])
    if p["has_sc"]:
        sc = bn(conv(x, p["ws"], stride, "VALID"), p["bns"])
    else:
        sc = x
    return jax.nn.relu(out + sc)


# ---------------------------------------------------------------------------
if __name__ == "__main__":
    # Small config consistent with the module: in_planes=4, planes=4, stride=1
    # => expansion*planes=16 != in_planes, so the projection shortcut is active.
    N, in_planes, planes, H, W, stride = 2, 4, 4, 16, 16, 1

    key = jax.random.PRNGKey(0)
    kx, kp = jax.random.split(key)
    x = jax.random.normal(kx, (N, in_planes, H, W), jnp.float32)
    params = make_params(kp, in_planes, planes, stride)

    out = jax.block_until_ready(bottleneck_forward(x, params, stride))
    ref = jax.block_until_ready(reference_forward(x, params, stride))

    assert out.shape == ref.shape == (N, 4 * planes, H // stride, W // stride)
    # bf16 matmul operands (f32 accumulation) -> slightly looser tolerance than f32.
    assert jnp.allclose(out, ref, rtol=2e-2, atol=2e-2), "mismatch vs reference"

    print("KERNEL_OK")
</pallas_src>

<mosaic_0001>
module attributes {stable_mosaic.version = 11 : i64} {
  func.func @_mm_bias_relu_kernel(%arg0: i32, %arg1: memref<512x128xbf16, #tpu.memory_space<vmem>>, %arg2: memref<128x128xbf16, #tpu.memory_space<vmem>>, %arg3: memref<1x128xf32, #tpu.memory_space<vmem>>, %arg4: memref<512x128xbf16, #tpu.memory_space<vmem>>) attributes {dimension_semantics = [#tpu.dimension_semantics<parallel>], iteration_bounds = array<i64: 1>, scalar_prefetch = 0 : i64, scratch_operands = 0 : i64, tpu.core_type = #tpu.core_type<tc>, window_params = [{transform_indices = @transform_0, window_bounds = array<i64: 512, 128>}, {pipeline_mode = #tpu.pipeline_mode<synchronous>, transform_indices = @transform_1, window_bounds = array<i64: 128, 128>}, {pipeline_mode = #tpu.pipeline_mode<synchronous>, transform_indices = @transform_2, window_bounds = array<i64: 1, 128>}, {transform_indices = @transform_3, window_bounds = array<i64: 512, 128>}]} {
    %c0 = arith.constant 0 : index
    %c0_0 = arith.constant 0 : index
    %0 = vector.load %arg1[%c0, %c0_0] : memref<512x128xbf16, #tpu.memory_space<vmem>>, vector<512x128xbf16>
    %c0_1 = arith.constant 0 : index
    %c0_2 = arith.constant 0 : index
    %1 = vector.load %arg2[%c0_1, %c0_2] : memref<128x128xbf16, #tpu.memory_space<vmem>>, vector<128x128xbf16>
    %cst = arith.constant dense<0.000000e+00> : vector<512x128xf32>
    %2 = tpu.matmul %0, %1, %cst {dimension_numbers = #tpu.dot_dimension_numbers<[1], [0], [0], [1], [0, 0, 1, 1], [], []>} : vector<512x128xbf16>, vector<128x128xbf16>, vector<512x128xf32> -> vector<512x128xf32>
    %c0_3 = arith.constant 0 : index
    %c0_4 = arith.constant 0 : index
    %3 = vector.load %arg3[%c0_3, %c0_4] : memref<1x128xf32, #tpu.memory_space<vmem>>, vector<1x128xf32>
    %4 = vector.broadcast %3 : vector<1x128xf32> to vector<512x128xf32>
    %5 = arith.addf %2, %4 : vector<512x128xf32>
    %cst_5 = arith.constant 0.000000e+00 : f32
    %6 = vector.broadcast %cst_5 : f32 to vector<512x128xf32>
    %7 = arith.maximumf %5, %6 : vector<512x128xf32>
    %8 = arith.truncf %7 : vector<512x128xf32> to vector<512x128xbf16>
    %c0_6 = arith.constant 0 : index
    %c0_7 = arith.constant 0 : index
    %9 = vector.load %arg4[%c0_6, %c0_7] : memref<512x128xbf16, #tpu.memory_space<vmem>>, vector<512x128xbf16>
    tpu.vector_store %arg4[%c0_6, %c0_7], %8 {strides = array<i32>} : memref<512x128xbf16, #tpu.memory_space<vmem>>, vector<512x128xbf16>,
    return
  }
  func.func @transform_0(%arg0: i32) -> (i32, i32) {
    %c0_i32 = arith.constant 0 : i32
    %c0_i32_0 = arith.constant 0 : i32
    return %arg0, %c0_i32 : i32, i32
  }
  func.func @transform_1(%arg0: i32) -> (i32, i32) {
    %c0_i32 = arith.constant 0 : i32
    %c0_i32_0 = arith.constant 0 : i32
    %c0_i32_1 = arith.constant 0 : i32
    return %c0_i32, %c0_i32_0 : i32, i32
  }
  func.func @transform_2(%arg0: i32) -> (i32, i32) {
    %c0_i32 = arith.constant 0 : i32
    %c0_i32_0 = arith.constant 0 : i32
    %c0_i32_1 = arith.constant 0 : i32
    return %c0_i32, %c0_i32_0 : i32, i32
  }
  func.func @transform_3(%arg0: i32) -> (i32, i32) {
    %c0_i32 = arith.constant 0 : i32
    %c0_i32_0 = arith.constant 0 : i32
    return %arg0, %c0_i32 : i32, i32
  }
}

</mosaic_0001>

<llo_original>
// kernel: tpu_custom_call.1
$region0: #{tpu_custom_call.1}
  #allocation0 [shape = 'u32[]', space=smem, size = 0x4, offset = 0x4, fixed_abs, tag = 'smem constant byte address 0x4 - core index']
  #allocation1 [shape = 'u32[72,128]{1,0:T(1,128)}', space=vmem, size = 0x9000, scoped, tag = 'internal scratch']
  %s0 = inlined_call_operand.hbm [shape: bf16[512,128], index: 0, kind: input, shape index: {}]
  %s1 = inlined_call_operand.hbm [shape: bf16[128,128], index: 1, kind: input, shape index: {}]
  %s2 = inlined_call_operand.vmem [shape: f32[1,128], index: 2, kind: input, shape index: {}]
  %s3 = inlined_call_operand.hbm [shape: bf16[512,128], index: 3, kind: output, shape index: {}]
  %s4 = sld [smem:[#allocation0]]
  $region30: #{tpu_custom_call.1} parent=0
    _
  %s6 = ssub.s32 1, %s4
  %s7 = scalar_select 0, %s6, %s4
  $region1: #{tpu_custom_call.1} parent=0
    #allocation2 [shape = 'u8[131072]{0}', space=vmem, size = 0x20000, scoped, tag = 'input window, operand 0, single buffered']
    #allocation3 [shape = 's32[1]{0}', space=sflag, size = 0x4, scoped, tag = 'scoped memory for tpu_custom_call.1']
    #allocation4 [shape = 's32[1]{0}', space=sflag, size = 0x4, scoped, tag = 'scoped memory for tpu_custom_call.1']
    #allocation5 [shape = 'u8[32768]{0}', space=vmem, size = 0x8000, scoped, tag = 'input window, operand 1, single buffered']
    #allocation6 [shape = 's32[1]{0}', space=sflag, size = 0x4, scoped, tag = 'scoped memory for tpu_custom_call.1']
    #allocation7 [shape = 'u8[131072]{0}', space=vmem, size = 0x20000, scoped, tag = 'output window, operand 0, single buffered']
    %8 = vsyncpa [#allocation3], 0
    %9 = vsyncpa [#allocation6], 0
    %10 = vsyncpa [#allocation4], 0
    // Predicated region
    $region2: #{tpu_custom_call.1} parent=1 // pred_check
      _
    $region3: #{tpu_custom_call.1} parent=1 // pred_check_branch
      %12 = sbr.rel (0) target = $region5
    $region4: #{tpu_custom_call.1} parent=1 // pred_region
      %14 = vsyncadd [#allocation3], 0
      %s15 = sshll.u32 %s0, 4
      %s16 = int_to_ptr.hbm [resolvable:$true] %s15
      %s17 = sshll.u32 [#allocation2], 4
      %s18 = int_to_ptr.vmem [resolvable:$true] %s17
      %23 = dma.hbm_to_vmem [thread:$0]  %s16, 4096, %s18, [#allocation3], 64, 64, 4
    $region5: #{tpu_custom_call.1} parent=1 // pred_fallthru
      _
    // Predicated region
    $region6: #{tpu_custom_call.1} parent=1 // pred_check
      _
    $region7: #{tpu_custom_call.1} parent=1 // pred_check_branch
      %25 = sbr.rel (0) target = $region9
    $region8: #{tpu_custom_call.1} parent=1 // pred_region
      %27 = vsyncadd [#allocation6], 0
      %s28 = sshll.u32 %s1, 4
      %s29 = int_to_ptr.hbm [resolvable:$true] %s28
      %s30 = sshll.u32 [#allocation5], 4
      %s31 = int_to_ptr.vmem [resolvable:$true] %s30
      %36 = dma.hbm_to_vmem [thread:$0]  %s29, 1024, %s31, [#allocation6], 64, 64, 4
    $region9: #{tpu_custom_call.1} parent=1 // pred_fallthru
      _
    // Predicated region
    $region10: #{tpu_custom_call.1} parent=1 // pred_check
      _
    $region11: #{tpu_custom_call.1} parent=1 // pred_check_branch
      %38 = sbr.rel (0) target = $region13
    $region12: #{tpu_custom_call.1} parent=1 // pred_region
      _
    $region13: #{tpu_custom_call.1} parent=1 // pred_fallthru
      _
    // Predicated region
    $region14: #{tpu_custom_call.1} parent=1 // pred_check
      _
    $region15: #{tpu_custom_call.1} parent=1 // pred_check_branch
      %40 = sbr.rel (0) target = $region17
    $region16: #{tpu_custom_call.1} parent=1 // pred_region
      %42 = dma.done [#allocation3], 4096
    $region17: #{tpu_custom_call.1} parent=1 // pred_fallthru
      _
    // Predicated region
    $region18: #{tpu_custom_call.1} parent=1 // pred_check
      _
    $region19: #{tpu_custom_call.1} parent=1 // pred_check_branch
      %44 = sbr.rel (0) target = $region21
    $region20: #{tpu_custom_call.1} parent=1 // pred_region
      %46 = dma.done [#allocation6], 1024
    $region21: #{tpu_custom_call.1} parent=1 // pred_fallthru
      _
    %v47 = vld [vmem:[#allocation2] sm:$0xf]
    %v48 = vld [vmem:[#allocation2 + $0x4] sm:$0xf]
    %v49 = vld [vmem:[#allocation2 + $0x8] sm:$0xf]
    %v50 = vld [vmem:[#allocation2 + $0xc] sm:$0xf]
    %v51 = vld [vmem:[#allocation2 + $0x10] sm:$0xf]
    %v52 = vld [vmem:[#allocation2 + $0x14] sm:$0xf]
    %v53 = vld [vmem:[#allocation2 + $0x18] sm:$0xf]
    %v54 = vld [vmem:[#allocation2 + $0x1c] sm:$0xf]
    %v55 = vld [vmem:[#allocation2 + $0x20] sm:$0xf]
    %v56 = vld [vmem:[#allocation2 + $0x24] sm:$0xf]
    %v57 = vld [vmem:[#allocation2 + $0x28] sm:$0xf]
    %v58 = vld [vmem:[#allocation2 + $0x2c] sm:$0xf]
    %v59 = vld [vmem:[#allocation2 + $0x30] sm:$0xf]
    %v60 = vld [vmem:[#allocation2 + $0x34] sm:$0xf]
    %v61 = vld [vmem:[#allocation2 + $0x38] sm:$0xf]
    %v62 = vld [vmem:[#allocation2 + $0x3c] sm:$0xf]
    %v63 = vld [vmem:[#allocation2 + $0x40] sm:$0xf]
    %v64 = vld [vmem:[#allocation2 + $0x44] sm:$0xf]
    %v65 = vld [vmem:[#allocation2 + $0x48] sm:$0xf]
    %v66 = vld [vmem:[#allocation2 + $0x4c] sm:$0xf]
    %v67 = vld [vmem:[#allocation2 + $0x50] sm:$0xf]
    %v68 = vld [vmem:[#allocation2 + $0x54] sm:$0xf]
    %v69 = vld [vmem:[#allocation2 + $0x58] sm:$0xf]
    %v70 = vld [vmem:[#allocation2 + $0x5c] sm:$0xf]
    %v71 = vld [vmem:[#allocation2 + $0x60] sm:$0xf]
    %v72 = vld [vmem:[#allocation2 + $0x64] sm:$0xf]
    %v73 = vld [vmem:[#allocation2 + $0x68] sm:$0xf]
    %v74 = vld [vmem:[#allocation2 + $0x6c] sm:$0xf]
    %v75 = vld [vmem:[#allocation2 + $0x70] sm:$0xf]
    %v76 = vld [vmem:[#allocation2 + $0x74] sm:$0xf]
    %v77 = vld [vmem:[#allocation2 + $0x78] sm:$0xf]
    %v78 = vld [vmem:[#allocation2 + $0x7c] sm:$0xf]
    %v79 = vld [vmem:[#allocation2 + $0x80] sm:$0xf]
    %v80 = vld [vmem:[#allocation2 + $0x84] sm:$0xf]
    %v81 = vld [vmem:[#allocation2 + $0x88] sm:$0xf]
    %v82 = vld [vmem:[#allocation2 + $0x8c] sm:$0xf]
    %v83 = vld [vmem:[#allocation2 + $0x90] sm:$0xf]
    %v84 = vld [vmem:[#allocation2 + $0x94] sm:$0xf]
    %v85 = vld [vmem:[#allocation2 + $0x98] sm:$0xf]
    %v86 = vld [vmem:[#allocation2 + $0x9c] sm:$0xf]
    %v87 = vld [vmem:[#allocation2 + $0xa0] sm:$0xf]
    %v88 = vld [vmem:[#allocation2 + $0xa4] sm:$0xf]
    %v89 = vld [vmem:[#allocation2 + $0xa8] sm:$0xf]
    %v90 = vld [vmem:[#allocation2 + $0xac] sm:$0xf]
    %v91 = vld [vmem:[#allocation2 + $0xb0] sm:$0xf]
    %v92 = vld [vmem:[#allocation2 + $0xb4] sm:$0xf]
    %v93 = vld [vmem:[#allocation2 + $0xb8] sm:$0xf]
    %v94 = vld [vmem:[#allocation2 + $0xbc] sm:$0xf]
    %v95 = vld [vmem:[#allocation2 + $0xc0] sm:$0xf]
    %v96 = vld [vmem:[#allocation2 + $0xc4] sm:$0xf]
    %v97 = vld [vmem:[#allocation2 + $0xc8] sm:$0xf]
    %v98 = vld [vmem:[#allocation2 + $0xcc] sm:$0xf]
    %v99 = vld [vmem:[#allocation2 + $0xd0] sm:$0xf]
    %v100 = vld [vmem:[#allocation2 + $0xd4] sm:$0xf]
    %v101 = vld [vmem:[#allocation2 + $0xd8] sm:$0xf]
    %v102 = vld [vmem:[#allocation2 + $0xdc] sm:$0xf]
    %v103 = vld [vmem:[#allocation2 + $0xe0] sm:$0xf]
    %v104 = vld [vmem:[#allocation2 + $0xe4] sm:$0xf]
    %v105 = vld [vmem:[#allocation2 + $0xe8] sm:$0xf]
    %v106 = vld [vmem:[#allocation2 + $0xec] sm:$0xf]
    %v107 = vld [vmem:[#allocation2 + $0xf0] sm:$0xf]
    %v108 = vld [vmem:[#allocation2 + $0xf4] sm:$0xf]
    %v109 = vld [vmem:[#allocation2 + $0xf8] sm:$0xf]
    %v110 = vld [vmem:[#allocation2 + $0xfc] sm:$0xf]
    %v111 = vld [vmem:[#allocation5] sm:$0xf]
    %v112 = vld [vmem:[#allocation5 + $0x4] sm:$0xf]
    %v113 = vld [vmem:[#allocation5 + $0x8] sm:$0xf]
    %v114 = vld [vmem:[#allocation5 + $0xc] sm:$0xf]
    %v115 = vld [vmem:[#allocation5 + $0x10] sm:$0xf]
    %v116 = vld [vmem:[#allocation5 + $0x14] sm:$0xf]
    %v117 = vld [vmem:[#allocation5 + $0x18] sm:$0xf]
    %v118 = vld [vmem:[#allocation5 + $0x1c] sm:$0xf]
    %v119 = vld [vmem:[#allocation5 + $0x20] sm:$0xf]
    %v120 = vld [vmem:[#allocation5 + $0x24] sm:$0xf]
    %v121 = vld [vmem:[#allocation5 + $0x28] sm:$0xf]
    %v122 = vld [vmem:[#allocation5 + $0x2c] sm:$0xf]
    %v123 = vld [vmem:[#allocation5 + $0x30] sm:$0xf]
    %v124 = vld [vmem:[#allocation5 + $0x34] sm:$0xf]
    %v125 = vld [vmem:[#allocation5 + $0x38] sm:$0xf]
    %v126 = vld [vmem:[#allocation5 + $0x3c] sm:$0xf]
    %v127 = vld [vmem:[%s2] sm:$0x1]
    %v129 = vperm.slane %v127, 0
    %v195 = vunpack.c.l.b16 %v47
    %v196 = vunpack.c.l.b16 %v48
    %v197 = vunpack.c.l.b16 %v49
    %v198 = vunpack.c.l.b16 %v50
    %v199 = vunpack.c.l.b16 %v51
    %v200 = vunpack.c.l.b16 %v52
    %v201 = vunpack.c.l.b16 %v53
    %v202 = vunpack.c.l.b16 %v54
    %v203 = vunpack.c.l.b16 %v55
    %v204 = vunpack.c.l.b16 %v56
    %v205 = vunpack.c.l.b16 %v57
    %v206 = vunpack.c.l.b16 %v58
    %v207 = vunpack.c.l.b16 %v59
    %v208 = vunpack.c.l.b16 %v60
    %v209 = vunpack.c.l.b16 %v61
    %v210 = vunpack.c.l.b16 %v62
    %v211 = vunpack.c.l.b16 %v63
    %v212 = vunpack.c.l.b16 %v64
    %v213 = vunpack.c.l.b16 %v65
    %v214 = vunpack.c.l.b16 %v66
    %v215 = vunpack.c.l.b16 %v67
    %v216 = vunpack.c.l.b16 %v68
    %v217 = vunpack.c.l.b16 %v69
    %v218 = vunpack.c.l.b16 %v70
    %v219 = vunpack.c.l.b16 %v71
    %v220 = vunpack.c.l.b16 %v72
    %v221 = vunpack.c.l.b16 %v73
    %v222 = vunpack.c.l.b16 %v74
    %v223 = vunpack.c.l.b16 %v75
    %v224 = vunpack.c.l.b16 %v76
    %v225 = vunpack.c.l.b16 %v77
    %v226 = vunpack.c.l.b16 %v78
    %v227 = vunpack.c.l.b16 %v79
    %v228 = vunpack.c.l.b16 %v80
    %v229 = vunpack.c.l.b16 %v81
    %v230 = vunpack.c.l.b16 %v82
    %v231 = vunpack.c.l.b16 %v83
    %v232 = vunpack.c.l.b16 %v84
    %v233 = vunpack.c.l.b16 %v85
    %v234 = vunpack.c.l.b16 %v86
    %v235 = vunpack.c.l.b16 %v87
    %v236 = vunpack.c.l.b16 %v88
    %v237 = vunpack.c.l.b16 %v89
    %v238 = vunpack.c.l.b16 %v90
    %v239 = vunpack.c.l.b16 %v91
    %v240 = vunpack.c.l.b16 %v92
    %v241 = vunpack.c.l.b16 %v93
    %v242 = vunpack.c.l.b16 %v94
    %v243 = vunpack.c.l.b16 %v95
    %v244 = vunpack.c.l.b16 %v96
    %v245 = vunpack.c.l.b16 %v97
    %v246 = vunpack.c.l.b16 %v98
    %v247 = vunpack.c.l.b16 %v99
    %v248 = vunpack.c.l.b16 %v100
    %v249 = vunpack.c.l.b16 %v101
    %v250 = vunpack.c.l.b16 %v102
    %v251 = vunpack.c.l.b16 %v103
    %v252 = vunpack.c.l.b16 %v104
    %v253 = vunpack.c.l.b16 %v105
    %v254 = vunpack.c.l.b16 %v106
    %v255 = vunpack.c.l.b16 %v107
    %v256 = vunpack.c.l.b16 %v108
    %v257 = vunpack.c.l.b16 %v109
    %v258 = vunpack.c.l.b16 %v110
    %v259 = vpack.c.b16 %v196, %v195
    %v260 = vpack.c.b16 %v198, %v197
    %v261 = vpack.c.b16 %v200, %v199
    %v262 = vpack.c.b16 %v202, %v201
    %v263 = vpack.c.b16 %v204, %v203
    %v264 = vpack.c.b16 %v206, %v205
    %v265 = vpack.c.b16 %v208, %v207
    %v266 = vpack.c.b16 %v210, %v209
    %v267 = vpack.c.b16 %v212, %v211
    %v268 = vpack.c.b16 %v214, %v213
    %v269 = vpack.c.b16 %v216, %v215
    %v270 = vpack.c.b16 %v218, %v217
    %v271 = vpack.c.b16 %v220, %v219
    %v272 = vpack.c.b16 %v222, %v221
    %v273 = vpack.c.b16 %v224, %v223
    %v274 = vpack.c.b16 %v226, %v225
    %v275 = vpack.c.b16 %v228, %v227
    %v276 = vpack.c.b16 %v230, %v229
    %v277 = vpack.c.b16 %v232, %v231
    %v278 = vpack.c.b16 %v234, %v233
    %v279 = vpack.c.b16 %v236, %v235
    %v280 = vpack.c.b16 %v238, %v237
    %v281 = vpack.c.b16 %v240, %v239
    %v282 = vpack.c.b16 %v242, %v241
    %v283 = vpack.c.b16 %v244, %v243
    %v284 = vpack.c.b16 %v246, %v245
    %v285 = vpack.c.b16 %v248, %v247
    %v286 = vpack.c.b16 %v250, %v249
    %v287 = vpack.c.b16 %v252, %v251
    %v288 = vpack.c.b16 %v254, %v253
    %v289 = vpack.c.b16 %v256, %v255
    %v290 = vpack.c.b16 %v258, %v257
    %v339 = vunpack.c.l.b16 %v111
    %v340 = vunpack.c.l.b16 %v112
    %v341 = vunpack.c.l.b16 %v113
    %v342 = vunpack.c.l.b16 %v114
    %v343 = vunpack.c.l.b16 %v115
    %v344 = vunpack.c.l.b16 %v116
    %v345 = vunpack.c.l.b16 %v117
    %v346 = vunpack.c.l.b16 %v118
    %v347 = vunpack.c.l.b16 %v119
    %v348 = vunpack.c.l.b16 %v120
    %v349 = vunpack.c.l.b16 %v121
    %v350 = vunpack.c.l.b16 %v122
    %v351 = vunpack.c.l.b16 %v123
    %v352 = vunpack.c.l.b16 %v124
    %v353 = vunpack.c.l.b16 %v125
    %v354 = vunpack.c.l.b16 %v126
    %v355 = vpack.c.b16 %v340, %v339
    %v356 = vpack.c.b16 %v342, %v341
    %v357 = vpack.c.b16 %v344, %v343
    %v358 = vpack.c.b16 %v346, %v345
    %v359 = vpack.c.b16 %v348, %v347
    %v360 = vpack.c.b16 %v350, %v349
    %v361 = vpack.c.b16 %v352, %v351
    %v362 = vpack.c.b16 %v354, %v353
    %371 = vmatpush.bf16.msra.mxu0 %v362
    %372 = vmatpush.bf16.msra.mxu0 %v361
    %373 = vmatpush.bf16.msra.mxu0 %v360
    %374 = vmatpush.bf16.msra.mxu0 %v359
    %375 = vmatpush.bf16.msra.mxu0 %v358
    %376 = vmatpush.bf16.msra.mxu0 %v357
    %377 = vmatpush.bf16.msra.mxu0 %v356
    %378 = vmatpush.bf16.msra.mxu0 %v355
    %379 = vmatmul.bf16.gmra.mxu0 %v259
    %v380 = vpop.f32.mrf.mxu0
    %v381 = vadd.f32 %v129, %v380
    %v382 = vpop.f32.mrf.mxu0
    %v383 = vadd.f32 %v129, %v382
    %384 = vmatmul.bf16.gmra.mxu0 %v260
    %v385 = vpop.f32.mrf.mxu0
    %v386 = vadd.f32 %v129, %v385
    %v387 = vpop.f32.mrf.mxu0
    %v388 = vadd.f32 %v129, %v387
    %389 = vmatmul.bf16.gmra.mxu0 %v261
    %v390 = vpop.f32.mrf.mxu0
    %v391 = vadd.f32 %v129, %v390
    %v392 = vpop.f32.mrf.mxu0
    %v393 = vadd.f32 %v129, %v392
    %394 = vmatmul.bf16.gmra.mxu0 %v262
    %v395 = vpop.f32.mrf.mxu0
    %v396 = vadd.f32 %v129, %v395
    %v397 = vpop.f32.mrf.mxu0
    %v398 = vadd.f32 %v129, %v397
    %399 = vmatmul.bf16.gmra.mxu0 %v263
    %v400 = vpop.f32.mrf.mxu0
    %v401 = vadd.f32 %v129, %v400
    %v402 = vpop.f32.mrf.mxu0
    %v403 = vadd.f32 %v129, %v402
    %404 = vmatmul.bf16.gmra.mxu0 %v264
    %v405 = vpop.f32.mrf.mxu0
    %v406 = vadd.f32 %v129, %v405
    %v407 = vpop.f32.mrf.mxu0
    %v408 = vadd.f32 %v129, %v407
    %409 = vmatmul.bf16.gmra.mxu0 %v265
    %v410 = vpop.f32.mrf.mxu0
    %v411 = vadd.f32 %v129, %v410
    %v412 = vpop.f32.mrf.mxu0
    %v413 = vadd.f32 %v129, %v412
    %414 = vmatmul.bf16.gmra.mxu0 %v266
    %v415 = vpop.f32.mrf.mxu0
    %v416 = vadd.f32 %v129, %v415
    %v417 = vpop.f32.mrf.mxu0
    %v418 = vadd.f32 %v129, %v417
    %419 = vmatmul.bf16.gmra.mxu0 %v267
    %v420 = vpop.f32.mrf.mxu0
    %v421 = vadd.f32 %v129, %v420
    %v422 = vpop.f32.mrf.mxu0
    %v423 = vadd.f32 %v129, %v422
    %424 = vmatmul.bf16.gmra.mxu0 %v268
    %v425 = vpop.f32.mrf.mxu0
    %v426 = vadd.f32 %v129, %v425
    %v427 = vpop.f32.mrf.mxu0
    %v428 = vadd.f32 %v129, %v427
    %429 = vmatmul.bf16.gmra.mxu0 %v269
    %v430 = vpop.f32.mrf.mxu0
    %v431 = vadd.f32 %v129, %v430
    %v432 = vpop.f32.mrf.mxu0
    %v433 = vadd.f32 %v129, %v432
    %434 = vmatmul.bf16.gmra.mxu0 %v270
    %v435 = vpop.f32.mrf.mxu0
    %v436 = vadd.f32 %v129, %v435
    %v437 = vpop.f32.mrf.mxu0
    %v438 = vadd.f32 %v129, %v437
    %439 = vmatmul.bf16.gmra.mxu0 %v271
    %v440 = vpop.f32.mrf.mxu0
    %v441 = vadd.f32 %v129, %v440
    %v442 = vpop.f32.mrf.mxu0
    %v443 = vadd.f32 %v129, %v442
    %444 = vmatmul.bf16.gmra.mxu0 %v272
    %v445 = vpop.f32.mrf.mxu0
    %v446 = vadd.f32 %v129, %v445
    %v447 = vpop.f32.mrf.mxu0
    %v448 = vadd.f32 %v129, %v447
    %449 = vmatmul.bf16.gmra.mxu0 %v273
    %v450 = vpop.f32.mrf.mxu0
    %v451 = vadd.f32 %v129, %v450
    %v452 = vpop.f32.mrf.mxu0
    %v453 = vadd.f32 %v129, %v452
    %454 = vmatmul.bf16.gmra.mxu0 %v274
    %v455 = vpop.f32.mrf.mxu0
    %v456 = vadd.f32 %v129, %v455
    %v457 = vpop.f32.mrf.mxu0
    %v458 = vadd.f32 %v129, %v457
    %459 = vmatmul.bf16.gmra.mxu0 %v275
    %v460 = vpop.f32.mrf.mxu0
    %v461 = vadd.f32 %v129, %v460
    %v462 = vpop.f32.mrf.mxu0
    %v463 = vadd.f32 %v129, %v462
    %464 = vmatmul.bf16.gmra.mxu0 %v276
    %v465 = vpop.f32.mrf.mxu0
    %v466 = vadd.f32 %v129, %v465
    %v467 = vpop.f32.mrf.mxu0
    %v468 = vadd.f32 %v129, %v467
    %469 = vmatmul.bf16.gmra.mxu0 %v277
    %v470 = vpop.f32.mrf.mxu0
    %v471 = vadd.f32 %v129, %v470
    %v472 = vpop.f32.mrf.mxu0
    %v473 = vadd.f32 %v129, %v472
    %474 = vmatmul.bf16.gmra.mxu0 %v278
    %v475 = vpop.f32.mrf.mxu0
    %v476 = vadd.f32 %v129, %v475
    %v477 = vpop.f32.mrf.mxu0
    %v478 = vadd.f32 %v129, %v477
    %479 = vmatmul.bf16.gmra.mxu0 %v279
    %v480 = vpop.f32.mrf.mxu0
    %v481 = vadd.f32 %v129, %v480
    %v482 = vpop.f32.mrf.mxu0
    %v483 = vadd.f32 %v129, %v482
    %484 = vmatmul.bf16.gmra.mxu0 %v280
    %v485 = vpop.f32.mrf.mxu0
    %v486 = vadd.f32 %v129, %v485
    %v487 = vpop.f32.mrf.mxu0
    %v488 = vadd.f32 %v129, %v487
    %489 = vmatmul.bf16.gmra.mxu0 %v281
    %v490 = vpop.f32.mrf.mxu0
    %v491 = vadd.f32 %v129, %v490
    %v492 = vpop.f32.mrf.mxu0
    %v493 = vadd.f32 %v129, %v492
    %494 = vmatmul.bf16.gmra.mxu0 %v282
    %v495 = vpop.f32.mrf.mxu0
    %v496 = vadd.f32 %v129, %v495
    %v497 = vpop.f32.mrf.mxu0
    %v498 = vadd.f32 %v129, %v497
    %499 = vmatmul.bf16.gmra.mxu0 %v283
    %v500 = vpop.f32.mrf.mxu0
    %v501 = vadd.f32 %v129, %v500
    %v502 = vpop.f32.mrf.mxu0
    %v503 = vadd.f32 %v129, %v502
    %504 = vmatmul.bf16.gmra.mxu0 %v284
    %v505 = vpop.f32.mrf.mxu0
    %v506 = vadd.f32 %v129, %v505
    %v507 = vpop.f32.mrf.mxu0
    %v508 = vadd.f32 %v129, %v507
    %509 = vmatmul.bf16.gmra.mxu0 %v285
    %v510 = vpop.f32.mrf.mxu0
    %v511 = vadd.f32 %v129, %v510
    %v512 = vpop.f32.mrf.mxu0
    %v513 = vadd.f32 %v129, %v512
    %514 = vmatmul.bf16.gmra.mxu0 %v286
    %v515 = vpop.f32.mrf.mxu0
    %v516 = vadd.f32 %v129, %v515
    %v517 = vpop.f32.mrf.mxu0
    %v518 = vadd.f32 %v129, %v517
    %519 = vmatmul.bf16.gmra.mxu0 %v287
    %v520 = vpop.f32.mrf.mxu0
    %v521 = vadd.f32 %v129, %v520
    %v522 = vpop.f32.mrf.mxu0
    %v523 = vadd.f32 %v129, %v522
    %524 = vmatmul.bf16.gmra.mxu0 %v288
    %v525 = vpop.f32.mrf.mxu0
    %v526 = vadd.f32 %v129, %v525
    %v527 = vpop.f32.mrf.mxu0
    %v528 = vadd.f32 %v129, %v527
    %529 = vmatmul.bf16.gmra.mxu0 %v289
    %v530 = vpop.f32.mrf.mxu0
    %v531 = vadd.f32 %v129, %v530
    %v532 = vpop.f32.mrf.mxu0
    %v533 = vadd.f32 %v129, %v532
    %534 = vmatmul.bf16.gmra.mxu0 %v290
    %v535 = vpop.f32.mrf.mxu0
    %v536 = vadd.f32 %v129, %v535
    %v537 = vpop.f32.mrf.mxu0
    %v538 = vadd.f32 %v129, %v537
    %539 = vdwg.mxu0
    %v540 = vmax.f32 %v381, 0.0
    %v541 = vmax.f32 %v383, 0.0
    %v542 = vmax.f32 %v386, 0.0
    %v543 = vmax.f32 %v388, 0.0
    %v544 = vmax.f32 %v391, 0.0
    %v545 = vmax.f32 %v393, 0.0
    %v546 = vmax.f32 %v396, 0.0
    %v547 = vmax.f32 %v398, 0.0
    %v548 = vmax.f32 %v401, 0.0
    %v549 = vmax.f32 %v403, 0.0
    %v550 = vmax.f32 %v406, 0.0
    %v551 = vmax.f32 %v408, 0.0
    %v552 = vmax.f32 %v411, 0.0
    %v553 = vmax.f32 %v413, 0.0
    %v554 = vmax.f32 %v416, 0.0
    %v555 = vmax.f32 %v418, 0.0
    %v556 = vmax.f32 %v421, 0.0
    %v557 = vmax.f32 %v423, 0.0
    %v558 = vmax.f32 %v426, 0.0
    %v559 = vmax.f32 %v428, 0.0
    %v560 = vmax.f32 %v431, 0.0
    %v561 = vmax.f32 %v433, 0.0
    %v562 = vmax.f32 %v436, 0.0
    %v563 = vmax.f32 %v438, 0.0
    %v564 = vmax.f32 %v441, 0.0
    %v565 = vmax.f32 %v443, 0.0
    %v566 = vmax.f32 %v446, 0.0
    %v567 = vmax.f32 %v448, 0.0
    %v568 = vmax.f32 %v451, 0.0
    %v569 = vmax.f32 %v453, 0.0
    %v570 = vmax.f32 %v456, 0.0
    %v571 = vmax.f32 %v458, 0.0
    %v572 = vmax.f32 %v461, 0.0
    %v573 = vmax.f32 %v463, 0.0
    %v574 = vmax.f32 %v466, 0.0
    %v575 = vmax.f32 %v468, 0.0
    %v576 = vmax.f32 %v471, 0.0
    %v577 = vmax.f32 %v473, 0.0
    %v578 = vmax.f32 %v476, 0.0
    %v579 = vmax.f32 %v478, 0.0
    %v580 = vmax.f32 %v481, 0.0
    %v581 = vmax.f32 %v483, 0.0
    %v582 = vmax.f32 %v486, 0.0
    %v583 = vmax.f32 %v488, 0.0
    %v584 = vmax.f32 %v491, 0.0
    %v585 = vmax.f32 %v493, 0.0
    %v586 = vmax.f32 %v496, 0.0
    %v587 = vmax.f32 %v498, 0.0
    %v588 = vmax.f32 %v501, 0.0
    %v589 = vmax.f32 %v503, 0.0
    %v590 = vmax.f32 %v506, 0.0
    %v591 = vmax.f32 %v508, 0.0
    %v592 = vmax.f32 %v511, 0.0
    %v593 = vmax.f32 %v513, 0.0
    %v594 = vmax.f32 %v516, 0.0
    %v595 = vmax.f32 %v518, 0.0
    %v596 = vmax.f32 %v521, 0.0
    %v597 = vmax.f32 %v523, 0.0
    %v598 = vmax.f32 %v526, 0.0
    %v599 = vmax.f32 %v528, 0.0
    %v600 = vmax.f32 %v531, 0.0
    %v601 = vmax.f32 %v533, 0.0
    %v602 = vmax.f32 %v536, 0.0
    %v603 = vmax.f32 %v538, 0.0
    %v604 = vpack.c.bf16 %v540, %v540
    %v605 = vpack.c.bf16 %v541, %v541
    %v606 = vpack.c.bf16 %v542, %v542
    %v607 = vpack.c.bf16 %v543, %v543
    %v608 = vpack.c.bf16 %v544, %v544
    %v609 = vpack.c.bf16 %v545, %v545
    %v610 = vpack.c.bf16 %v546, %v546
    %v611 = vpack.c.bf16 %v547, %v547
    %v612 = vpack.c.bf16 %v548, %v548
    %v613 = vpack.c.bf16 %v549, %v549
    %v614 = vpack.c.bf16 %v550, %v550
    %v615 = vpack.c.bf16 %v551, %v551
    %v616 = vpack.c.bf16 %v552, %v552
    %v617 = vpack.c.bf16 %v553, %v553
    %v618 = vpack.c.bf16 %v554, %v554
    %v619 = vpack.c.bf16 %v555, %v555
    %v620 = vpack.c.bf16 %v556, %v556
    %v621 = vpack.c.bf16 %v557, %v557
    %v622 = vpack.c.bf16 %v558, %v558
    %v623 = vpack.c.bf16 %v559, %v559
    %v624 = vpack.c.bf16 %v560, %v560
    %v625 = vpack.c.bf16 %v561, %v561
    %v626 = vpack.c.bf16 %v562, %v562
    %v627 = vpack.c.bf16 %v563, %v563
    %v628 = vpack.c.bf16 %v564, %v564
    %v629 = vpack.c.bf16 %v565, %v565
    %v630 = vpack.c.bf16 %v566, %v566
    %v631 = vpack.c.bf16 %v567, %v567
    %v632 = vpack.c.bf16 %v568, %v568
    %v633 = vpack.c.bf16 %v569, %v569
    %v634 = vpack.c.bf16 %v570, %v570
    %v635 = vpack.c.bf16 %v571, %v571
    %v636 = vpack.c.bf16 %v572, %v572
    %v637 = vpack.c.bf16 %v573, %v573
    %v638 = vpack.c.bf16 %v574, %v574
    %v639 = vpack.c.bf16 %v575, %v575
    %v640 = vpack.c.bf16 %v576, %v576
    %v641 = vpack.c.bf16 %v577, %v577
    %v642 = vpack.c.bf16 %v578, %v578
    %v643 = vpack.c.bf16 %v579, %v579
    %v644 = vpack.c.bf16 %v580, %v580
    %v645 = vpack.c.bf16 %v581, %v581
    %v646 = vpack.c.bf16 %v582, %v582
    %v647 = vpack.c.bf16 %v583, %v583
    %v648 = vpack.c.bf16 %v584, %v584
    %v649 = vpack.c.bf16 %v585, %v585
    %v650 = vpack.c.bf16 %v586, %v586
    %v651 = vpack.c.bf16 %v587, %v587
    %v652 = vpack.c.bf16 %v588, %v588
    %v653 = vpack.c.bf16 %v589, %v589
    %v654 = vpack.c.bf16 %v590, %v590
    %v655 = vpack.c.bf16 %v591, %v591
    %v656 = vpack.c.bf16 %v592, %v592
    %v657 = vpack.c.bf16 %v593, %v593
    %v658 = vpack.c.bf16 %v594, %v594
    %v659 = vpack.c.bf16 %v595, %v595
    %v660 = vpack.c.bf16 %v596, %v596
    %v661 = vpack.c.bf16 %v597, %v597
    %v662 = vpack.c.bf16 %v598, %v598
    %v663 = vpack.c.bf16 %v599, %v599
    %v664 = vpack.c.bf16 %v600, %v600
    %v665 = vpack.c.bf16 %v601, %v601
    %v666 = vpack.c.bf16 %v602, %v602
    %v667 = vpack.c.bf16 %v603, %v603
    %668 = vst [vmem:[#allocation7] sm:$0xf] %v604
    %669 = vst [vmem:[#allocation7 + $0x4] sm:$0xf] %v605
    %670 = vst [vmem:[#allocation7 + $0x8] sm:$0xf] %v606
    %671 = vst [vmem:[#allocation7 + $0xc] sm:$0xf] %v607
    %672 = vst [vmem:[#allocation7 + $0x10] sm:$0xf] %v608
    %673 = vst [vmem:[#allocation7 + $0x14] sm:$0xf] %v609
    %674 = vst [vmem:[#allocation7 + $0x18] sm:$0xf] %v610
    %675 = vst [vmem:[#allocation7 + $0x1c] sm:$0xf] %v611
    %676 = vst [vmem:[#allocation7 + $0x20] sm:$0xf] %v612
    %677 = vst [vmem:[#allocation7 + $0x24] sm:$0xf] %v613
    %678 = vst [vmem:[#allocation7 + $0x28] sm:$0xf] %v614
    %679 = vst [vmem:[#allocation7 + $0x2c] sm:$0xf] %v615
    %680 = vst [vmem:[#allocation7 + $0x30] sm:$0xf] %v616
    %681 = vst [vmem:[#allocation7 + $0x34] sm:$0xf] %v617
    %682 = vst [vmem:[#allocation7 + $0x38] sm:$0xf] %v618
    %683 = vst [vmem:[#allocation7 + $0x3c] sm:$0xf] %v619
    %684 = vst [vmem:[#allocation7 + $0x40] sm:$0xf] %v620
    %685 = vst [vmem:[#allocation7 + $0x44] sm:$0xf] %v621
    %686 = vst [vmem:[#allocation7 + $0x48] sm:$0xf] %v622
    %687 = vst [vmem:[#allocation7 + $0x4c] sm:$0xf] %v623
    %688 = vst [vmem:[#allocation7 + $0x50] sm:$0xf] %v624
    %689 = vst [vmem:[#allocation7 + $0x54] sm:$0xf] %v625
    %690 = vst [vmem:[#allocation7 + $0x58] sm:$0xf] %v626
    %691 = vst [vmem:[#allocation7 + $0x5c] sm:$0xf] %v627
    %692 = vst [vmem:[#allocation7 + $0x60] sm:$0xf] %v628
    %693 = vst [vmem:[#allocation7 + $0x64] sm:$0xf] %v629
    %694 = vst [vmem:[#allocation7 + $0x68] sm:$0xf] %v630
    %695 = vst [vmem:[#allocation7 + $0x6c] sm:$0xf] %v631
    %696 = vst [vmem:[#allocation7 + $0x70] sm:$0xf] %v632
    %697 = vst [vmem:[#allocation7 + $0x74] sm:$0xf] %v633
    %698 = vst [vmem:[#allocation7 + $0x78] sm:$0xf] %v634
    %699 = vst [vmem:[#allocation7 + $0x7c] sm:$0xf] %v635
    %700 = vst [vmem:[#allocation7 + $0x80] sm:$0xf] %v636
    %701 = vst [vmem:[#allocation7 + $0x84] sm:$0xf] %v637
    %702 = vst [vmem:[#allocation7 + $0x88] sm:$0xf] %v638
    %703 = vst [vmem:[#allocation7 + $0x8c] sm:$0xf] %v639
    %704 = vst [vmem:[#allocation7 + $0x90] sm:$0xf] %v640
    %705 = vst [vmem:[#allocation7 + $0x94] sm:$0xf] %v641
    %706 = vst [vmem:[#allocation7 + $0x98] sm:$0xf] %v642
    %707 = vst [vmem:[#allocation7 + $0x9c] sm:$0xf] %v643
    %708 = vst [vmem:[#allocation7 + $0xa0] sm:$0xf] %v644
    %709 = vst [vmem:[#allocation7 + $0xa4] sm:$0xf] %v645
    %710 = vst [vmem:[#allocation7 + $0xa8] sm:$0xf] %v646
    %711 = vst [vmem:[#allocation7 + $0xac] sm:$0xf] %v647
    %712 = vst [vmem:[#allocation7 + $0xb0] sm:$0xf] %v648
    %713 = vst [vmem:[#allocation7 + $0xb4] sm:$0xf] %v649
    %714 = vst [vmem:[#allocation7 + $0xb8] sm:$0xf] %v650
    %715 = vst [vmem:[#allocation7 + $0xbc] sm:$0xf] %v651
    %716 = vst [vmem:[#allocation7 + $0xc0] sm:$0xf] %v652
    %717 = vst [vmem:[#allocation7 + $0xc4] sm:$0xf] %v653
    %718 = vst [vmem:[#allocation7 + $0xc8] sm:$0xf] %v654
    %719 = vst [vmem:[#allocation7 + $0xcc] sm:$0xf] %v655
    %720 = vst [vmem:[#allocation7 + $0xd0] sm:$0xf] %v656
    %721 = vst [vmem:[#allocation7 + $0xd4] sm:$0xf] %v657
    %722 = vst [vmem:[#allocation7 + $0xd8] sm:$0xf] %v658
    %723 = vst [vmem:[#allocation7 + $0xdc] sm:$0xf] %v659
    %724 = vst [vmem:[#allocation7 + $0xe0] sm:$0xf] %v660
    %725 = vst [vmem:[#allocation7 + $0xe4] sm:$0xf] %v661
    %726 = vst [vmem:[#allocation7 + $0xe8] sm:$0xf] %v662
    %727 = vst [vmem:[#allocation7 + $0xec] sm:$0xf] %v663
    %728 = vst [vmem:[#allocation7 + $0xf0] sm:$0xf] %v664
    %729 = vst [vmem:[#allocation7 + $0xf4] sm:$0xf] %v665
    %730 = vst [vmem:[#allocation7 + $0xf8] sm:$0xf] %v666
    %731 = vst [vmem:[#allocation7 + $0xfc] sm:$0xf] %v667
    // Predicated region
    $region22: #{tpu_custom_call.1} parent=1 // pred_check
      _
    $region23: #{tpu_custom_call.1} parent=1 // pred_check_branch
      %733 = sbr.rel (0) target = $region25
    $region24: #{tpu_custom_call.1} parent=1 // pred_region
      %735 = vsyncadd [#allocation4], 0
      %s736 = sshll.u32 [#allocation7], 4
      %s737 = int_to_ptr.vmem [resolvable:$true] %s736
      %s738 = sshll.u32 %s3, 4
      %s739 = int_to_ptr.hbm [resolvable:$true] %s738
      %744 = dma.vmem_to_hbm [thread:$0]  %s737, 4096, %s739, [#allocation4], 64, 64, 4
    $region25: #{tpu_custom_call.1} parent=1 // pred_fallthru
      _
    // Predicated region
    $region26: #{tpu_custom_call.1} parent=1 // pred_check
      _
    $region27: #{tpu_custom_call.1} parent=1 // pred_check_branch
      %746 = sbr.rel (0) target = $region29
    $region28: #{tpu_custom_call.1} parent=1 // pred_region
      %748 = dma.done [#allocation4], 4096
    $region29: #{tpu_custom_call.1} parent=1 // pred_fallthru
      _
    %749 = vsyncpa [#allocation3], 1
    %750 = vsyncpa [#allocation6], 1
    %751 = vsyncpa [#allocation4], 1

</llo_original>
